<compile_context>
chip_gen: v7x
topology: tpu7x:2x2x1
jax: 0.10.0
libtpu: 0.0.40
codegen_flags: <defaults>
</compile_context>

<pallas_src>
import functools

import jax
import jax.numpy as jnp
from jax.experimental import pallas as pl
from jax.experimental.pallas import tpu as pltpu

LANE = 128      # lane width (last dim)
SUBLANE = 8     # sublane width (second-to-last dim)


def _round_up(n, m):
    return ((n + m - 1) // m) * m


def mlp_kernel(x_ref, w1_ref, b1_ref, w2_ref, b2_ref, o_ref):
    # hidden = relu(x @ W1 + b1): MXU matmul with f32 accumulation,
    # bias add + ReLU in f32 on the VPU (hidden under the MXU).
    h = jnp.dot(x_ref[...], w1_ref[...], preferred_element_type=jnp.float32)
    h = h + b1_ref[...]                       # (TB, Hp) + (1, Hp) broadcast
    h = jnp.maximum(h, 0.0)                   # ReLU
    # out = h @ W2 + b2; cast h back to the compute dtype (bf16 path) so the
    # second matmul also runs narrow-operand / f32-accumulate on the MXU.
    y = jnp.dot(h.astype(w2_ref.dtype), w2_ref[...],
                preferred_element_type=jnp.float32)
    y = y + b2_ref[...]                       # (TB, Op) + (1, Op) broadcast
    o_ref[...] = y.astype(o_ref.dtype)


@functools.partial(jax.jit, static_argnames=("block_b", "compute_dtype"))
def net_forward(x, w1, b1, w2, b2, *, block_b=128, compute_dtype=jnp.float32):
    """Fused MLP forward: relu(x @ w1 + b1) @ w2 + b2.

    x:  (B, F)  float32
    w1: (F, H)  float32   (torch weight transposed: (in, out))
    b1: (1, H)  float32
    w2: (H, O)  float32
    b2: (1, O)  float32
    Returns (B, O) float32.
    """
    B, F = x.shape
    H = w1.shape[1]
    O = w2.shape[1]

    # Lane-pad every last dim to a multiple of 128; pad batch to a multiple of
    # the batch tile (itself a multiple of the 8-row sublane).
    Fp = _round_up(F, LANE)
    Hp = _round_up(H, LANE)
    Op = _round_up(O, LANE)
    tb = _round_up(min(block_b, _round_up(B, SUBLANE)), SUBLANE)
    Bp = _round_up(B, tb)

    # Zero-pad once in the wrapper (exact for this network: padded input
    # columns hit zero weight rows, padded hidden units have zero bias and
    # stay zero through ReLU and the zero rows of w2).
    xp = jnp.zeros((Bp, Fp), compute_dtype).at[:B, :F].set(x.astype(compute_dtype))
    w1p = jnp.zeros((Fp, Hp), compute_dtype).at[:F, :H].set(w1.astype(compute_dtype))
    w2p = jnp.zeros((Hp, Op), compute_dtype).at[:H, :O].set(w2.astype(compute_dtype))
    b1p = jnp.zeros((1, Hp), jnp.float32).at[:, :H].set(b1.astype(jnp.float32))
    b2p = jnp.zeros((1, Op), jnp.float32).at[:, :O].set(b2.astype(jnp.float32))

    grid = (Bp // tb,)
    bytes_per = jnp.dtype(compute_dtype).itemsize
    cost = pl.CostEstimate(
        flops=2 * Bp * (Fp * Hp + Hp * Op),
        transcendentals=0,
        bytes_accessed=(Bp * Fp + Fp * Hp + Hp * Op) * bytes_per
        + (Hp + Op) * 4 + Bp * Op * 4,
    )

    out = pl.pallas_call(
        mlp_kernel,
        out_shape=jax.ShapeDtypeStruct((Bp, Op), jnp.float32),
        grid=grid,
        in_specs=[
            pl.BlockSpec((tb, Fp), lambda i: (i, 0)),   # x: tiled over batch
            pl.BlockSpec((Fp, Hp), lambda i: (0, 0)),   # w1: resident in VMEM
            pl.BlockSpec((1, Hp), lambda i: (0, 0)),    # b1: resident
            pl.BlockSpec((Hp, Op), lambda i: (0, 0)),   # w2: resident
            pl.BlockSpec((1, Op), lambda i: (0, 0)),    # b2: resident
        ],
        out_specs=pl.BlockSpec((tb, Op), lambda i: (i, 0)),
        compiler_params=pltpu.CompilerParams(
            dimension_semantics=("parallel",),          # shard batch across TCs (v7x)
            vmem_limit_bytes=64 * 1024 * 1024,
        ),
        cost_estimate=cost,
    )(xp, w1p, b1p, w2p, b2p)

    return out[:B, :O]


def init_params(key, n_feature, n_hidden, n_output):
    """Deterministic init matching torch.nn.Linear parameter shapes.

    torch Linear weight is (out, in); we store the transpose (in, out).
    """
    k1, k2, k3, k4 = jax.random.split(key, 4)
    bound1 = 1.0 / jnp.sqrt(n_feature)
    bound2 = 1.0 / jnp.sqrt(n_hidden)
    w1 = jax.random.uniform(k1, (n_feature, n_hidden), jnp.float32, -bound1, bound1)
    b1 = jax.random.uniform(k2, (1, n_hidden), jnp.float32, -bound1, bound1)
    w2 = jax.random.uniform(k3, (n_hidden, n_output), jnp.float32, -bound2, bound2)
    b2 = jax.random.uniform(k4, (1, n_output), jnp.float32, -bound2, bound2)
    return w1, b1, w2, b2


if __name__ == "__main__":
    # Classification toy problem from the original script:
    #   Net(n_feature=2, n_hidden=10, n_output=2); x = 200 points, two clusters.
    n_feature, n_hidden, n_output = 2, 10, 2
    batch = 200

    key = jax.random.PRNGKey(0)
    kx, kp = jax.random.split(key)

    half = batch // 2
    x0 = 2.0 + jax.random.normal(kx, (half, n_feature), jnp.float32)
    x1 = -2.0 + jax.random.normal(jax.random.fold_in(kx, 1), (half, n_feature), jnp.float32)
    x = jnp.concatenate([x0, x1], axis=0)

    w1, b1, w2, b2 = init_params(kp, n_feature, n_hidden, n_output)

    # Plain-JAX reference of the same forward pass.
    ref = jnp.maximum(x @ w1 + b1, 0.0) @ w2 + b2

    # f32 MXU path (exact vs reference).
    out_f32 = net_forward(x, w1, b1, w2, b2, compute_dtype=jnp.float32)
    out_f32 = jax.block_until_ready(out_f32)
    assert out_f32.shape == (batch, n_output)
    assert jnp.allclose(out_f32, ref, atol=1e-5, rtol=1e-5)

    # bf16-operand / f32-accumulate MXU path (v6e/v7x fast path) — relaxed tol.
    out_bf16 = net_forward(x, w1, b1, w2, b2, compute_dtype=jnp.bfloat16)
    out_bf16 = jax.block_until_ready(out_bf16)
    assert out_bf16.shape == (batch, n_output)
    assert jnp.allclose(out_bf16, ref, atol=1e-1, rtol=5e-2)

    print("KERNEL_OK")
</pallas_src>

<mosaic_0001>
module attributes {stable_mosaic.version = 11 : i64} {
  func.func @mlp_kernel(%arg0: i32, %arg1: memref<128x128xf32, #tpu.memory_space<vmem>>, %arg2: memref<128x128xf32, #tpu.memory_space<vmem>>, %arg3: memref<1x128xf32, #tpu.memory_space<vmem>>, %arg4: memref<128x128xf32, #tpu.memory_space<vmem>>, %arg5: memref<1x128xf32, #tpu.memory_space<vmem>>, %arg6: memref<128x128xf32, #tpu.memory_space<vmem>>) attributes {dimension_semantics = [#tpu.dimension_semantics<parallel>], iteration_bounds = array<i64: 2>, scalar_prefetch = 0 : i64, scratch_operands = 0 : i64, tpu.core_type = #tpu.core_type<tc>, window_params = [{transform_indices = @transform_0, window_bounds = array<i64: 128, 128>}, {pipeline_mode = #tpu.pipeline_mode<synchronous>, transform_indices = @transform_1, window_bounds = array<i64: 128, 128>}, {pipeline_mode = #tpu.pipeline_mode<synchronous>, transform_indices = @transform_2, window_bounds = array<i64: 1, 128>}, {pipeline_mode = #tpu.pipeline_mode<synchronous>, transform_indices = @transform_3, window_bounds = array<i64: 128, 128>}, {pipeline_mode = #tpu.pipeline_mode<synchronous>, transform_indices = @transform_4, window_bounds = array<i64: 1, 128>}, {transform_indices = @transform_5, window_bounds = array<i64: 128, 128>}]} {
    %c0 = arith.constant 0 : index
    %c0_0 = arith.constant 0 : index
    %0 = vector.load %arg1[%c0, %c0_0] : memref<128x128xf32, #tpu.memory_space<vmem>>, vector<128x128xf32>
    %c0_1 = arith.constant 0 : index
    %c0_2 = arith.constant 0 : index
    %1 = vector.load %arg2[%c0_1, %c0_2] : memref<128x128xf32, #tpu.memory_space<vmem>>, vector<128x128xf32>
    %cst = arith.constant dense<0.000000e+00> : vector<128x128xf32>
    %2 = tpu.matmul %0, %1, %cst {dimension_numbers = #tpu.dot_dimension_numbers<[1], [0], [0], [1], [0, 0, 1, 1], [], []>} : vector<128x128xf32>, vector<128x128xf32>, vector<128x128xf32> -> vector<128x128xf32>
    %c0_3 = arith.constant 0 : index
    %c0_4 = arith.constant 0 : index
    %3 = vector.load %arg3[%c0_3, %c0_4] : memref<1x128xf32, #tpu.memory_space<vmem>>, vector<1x128xf32>
    %4 = vector.broadcast %3 : vector<1x128xf32> to vector<128x128xf32>
    %5 = arith.addf %2, %4 : vector<128x128xf32>
    %cst_5 = arith.constant 0.000000e+00 : f32
    %6 = vector.broadcast %cst_5 : f32 to vector<128x128xf32>
    %7 = arith.maximumf %5, %6 : vector<128x128xf32>
    %c0_6 = arith.constant 0 : index
    %c0_7 = arith.constant 0 : index
    %8 = vector.load %arg4[%c0_6, %c0_7] : memref<128x128xf32, #tpu.memory_space<vmem>>, vector<128x128xf32>
    %cst_8 = arith.constant dense<0.000000e+00> : vector<128x128xf32>
    %9 = tpu.matmul %7, %8, %cst_8 {dimension_numbers = #tpu.dot_dimension_numbers<[1], [0], [0], [1], [0, 0, 1, 1], [], []>} : vector<128x128xf32>, vector<128x128xf32>, vector<128x128xf32> -> vector<128x128xf32>
    %c0_9 = arith.constant 0 : index
    %c0_10 = arith.constant 0 : index
    %10 = vector.load %arg5[%c0_9, %c0_10] : memref<1x128xf32, #tpu.memory_space<vmem>>, vector<1x128xf32>
    %11 = vector.broadcast %10 : vector<1x128xf32> to vector<128x128xf32>
    %12 = arith.addf %9, %11 : vector<128x128xf32>
    %c0_11 = arith.constant 0 : index
    %c0_12 = arith.constant 0 : index
    %13 = vector.load %arg6[%c0_11, %c0_12] : memref<128x128xf32, #tpu.memory_space<vmem>>, vector<128x128xf32>
    tpu.vector_store %arg6[%c0_11, %c0_12], %12 {strides = array<i32>} : memref<128x128xf32, #tpu.memory_space<vmem>>, vector<128x128xf32>,
    return
  }
  func.func @transform_0(%arg0: i32) -> (i32, i32) {
    %c0_i32 = arith.constant 0 : i32
    %c0_i32_0 = arith.constant 0 : i32
    return %arg0, %c0_i32 : i32, i32
  }
  func.func @transform_1(%arg0: i32) -> (i32, i32) {
    %c0_i32 = arith.constant 0 : i32
    %c0_i32_0 = arith.constant 0 : i32
    %c0_i32_1 = arith.constant 0 : i32
    return %c0_i32, %c0_i32_0 : i32, i32
  }
  func.func @transform_2(%arg0: i32) -> (i32, i32) {
    %c0_i32 = arith.constant 0 : i32
    %c0_i32_0 = arith.constant 0 : i32
    %c0_i32_1 = arith.constant 0 : i32
    return %c0_i32, %c0_i32_0 : i32, i32
  }
  func.func @transform_3(%arg0: i32) -> (i32, i32) {
    %c0_i32 = arith.constant 0 : i32
    %c0_i32_0 = arith.constant 0 : i32
    %c0_i32_1 = arith.constant 0 : i32
    return %c0_i32, %c0_i32_0 : i32, i32
  }
  func.func @transform_4(%arg0: i32) -> (i32, i32) {
    %c0_i32 = arith.constant 0 : i32
    %c0_i32_0 = arith.constant 0 : i32
    %c0_i32_1 = arith.constant 0 : i32
    return %c0_i32, %c0_i32_0 : i32, i32
  }
  func.func @transform_5(%arg0: i32) -> (i32, i32) {
    %c0_i32 = arith.constant 0 : i32
    %c0_i32_0 = arith.constant 0 : i32
    return %arg0, %c0_i32 : i32, i32
  }
}

</mosaic_0001>

<llo_original>
// kernel: net_forward.1
$region0: #{net_forward.1}
  #allocation0 [shape = 'u32[]', space=smem, size = 0x4, offset = 0x4, fixed_abs, tag = 'smem constant byte address 0x4 - core index']
  #allocation1 [shape = 'u32[144,128]{1,0:T(1,128)}', space=vmem, size = 0x12000, scoped, tag = 'internal scratch']
  %s0 = inlined_call_operand.hbm [shape: f32[256,128], index: 0, kind: input, shape index: {}]
  %s1 = inlined_call_operand.hbm [shape: f32[128,128], index: 1, kind: input, shape index: {}]
  %s2 = inlined_call_operand.hbm [shape: f32[1,128], index: 2, kind: input, shape index: {}]
  %s3 = inlined_call_operand.hbm [shape: f32[128,128], index: 3, kind: input, shape index: {}]
  %s4 = inlined_call_operand.hbm [shape: f32[1,128], index: 4, kind: input, shape index: {}]
  %s5 = inlined_call_operand.hbm [shape: f32[256,128], index: 5, kind: output, shape index: {}]
  %s6 = sld [smem:[#allocation0]]
  $region73: #{net_forward.1} parent=0
    _
  %s8 = ssub.s32 1, %s6
  %s9 = scalar_select 0, %s8, %s6
  $region1: #{net_forward.1} parent=0
    #allocation2 [shape = 'u8[131072]{0}', space=vmem, size = 0x20000, scoped, tag = 'input window, operand 0']
    #allocation3 [shape = 's32[2]{0}', space=sflag, size = 0x8, scoped, tag = 'scoped memory for net_forward.1']
    #allocation4 [shape = 's32[2]{0}', space=sflag, size = 0x8, scoped, tag = 'scoped memory for net_forward.1']
    #allocation5 [shape = 'u8[65536]{0}', space=vmem, size = 0x10000, scoped, tag = 'input window, operand 1, single buffered']
    #allocation6 [shape = 's32[1]{0}', space=sflag, size = 0x4, scoped, tag = 'scoped memory for net_forward.1']
    #allocation7 [shape = 'u8[512]{0}', space=vmem, size = 0x400, scoped, tag = 'input window, operand 2, single buffered']
    #allocation8 [shape = 'u8[65536]{0}', space=vmem, size = 0x10000, scoped, tag = 'input window, operand 3, single buffered']
    #allocation9 [shape = 's32[1]{0}', space=sflag, size = 0x4, scoped, tag = 'scoped memory for net_forward.1']
    #allocation10 [shape = 'u8[512]{0}', space=vmem, size = 0x400, scoped, tag = 'input window, operand 4, single buffered']
    #allocation11 [shape = 'u8[131072]{0}', space=vmem, size = 0x20000, scoped, tag = 'output window, operand 0']
    %10 = vsyncpa [#allocation3], 0
    %s11 = scalar_lea.sflag [#allocation3], 1
    %12 = vsyncpa %s11, 0
    %13 = vsyncpa [#allocation6], 0
    %14 = vsyncpa [#allocation9], 0
    %15 = vsyncpa [#allocation4], 0
    %s16 = scalar_lea.sflag [#allocation4], 1
    %17 = vsyncpa %s16, 0
    loop: start=0, step=1, limit=4
    $region2: #{net_forward.1} parent=1 // loop_pre_header
      _
    $region3: #{net_forward.1} parent=1 // loop_header
      %s19 = sphi 0, %s23
      %p20 = scmp.ge.s32.totalorder %s19, 4
      %s29 = sphi 0, %s31
      %s32 = sphi 0, %s29
      %s33 = sphi 0, %s32
      %s49 = sphi 0, %s33
      %s53 = sphi 0, %s53
      %s55 = sphi 0, %s53
      %s56 = sphi 0, %s55
      %s70 = sphi 0, %s56
      %s74 = sphi 0, %s74
      %s76 = sphi 0, %s74
      %s77 = sphi 0, %s76
      %s91 = sphi 0, %s77
      %s95 = sphi 0, %s95
      %s97 = sphi 0, %s95
      %s98 = sphi 0, %s97
      %s112 = sphi 0, %s98
      %s116 = sphi 0, %s116
      %s118 = sphi 0, %s116
      %s119 = sphi 0, %s118
      %s133 = sphi 0, %s119
      %s139 = sphi 0, %s141
      %s142 = sphi 0, %s139
      %s143 = sphi 0, %s142
      %s159 = sphi 0, %s143
    $region4: #{net_forward.1} parent=1 // loop_header_branch
      %22 = sbr.rel (%p20) target = $region8
    $region5: #{net_forward.1} parent=1 // loop_body
      %s24 = ssub.s32 %s19, 1
      %s25 = ssub.s32 %s19, 2
      %s26 = sadd.s32 %s19, 1
      %s27 = ssub.s32 %s19, %s26
      %p28 = scmp.eq.s32.totalorder %s27, 0
      %s30 = sadd.s32 %s29, 1
      %s31 = scalar_select %p28, %s29, %s30
      %p34 = pneg %p28
      %p35 = scmp.eq.s32.totalorder %s19, 1
      %p36 = por %p34, %p35
      %p37 = scmp.ne.s32.totalorder %s29, %s32
      %p38 = scmp.eq.s32.totalorder %s19, 0
      %p39 = por %p37, %p38
      %p40 = scmp.ne.s32.totalorder %s29, %s32
      %p41 = scmp.eq.s32.totalorder %s24, 1
      %p42 = por %p40, %p41
      %p43 = scmp.ne.s32.totalorder %s32, %s33
      %p44 = scmp.eq.s32.totalorder %s24, 0
      %p45 = por %p43, %p44
      %p46 = scmp.ne.s32.totalorder %s32, %s33
      %p47 = scmp.eq.s32.totalorder %s25, 1
      %p48 = por %p46, %p47
      %p50 = scmp.ne.s32.totalorder %s33, %s49
      %p51 = scmp.eq.s32.totalorder %s25, 0
      %p52 = por %p50, %p51
      %s54 = sadd.s32 %s53, 1
      %p57 = scmp.eq.s32.totalorder %s19, 1
      %p58 = scmp.ne.s32.totalorder %s53, %s55
      %p59 = scmp.eq.s32.totalorder %s19, 0
      %p60 = por %p58, %p59
      %p61 = scmp.ne.s32.totalorder %s53, %s55
      %p62 = scmp.eq.s32.totalorder %s24, 1
      %p63 = por %p61, %p62
      %p64 = scmp.ne.s32.totalorder %s55, %s56
      %p65 = scmp.eq.s32.totalorder %s24, 0
      %p66 = por %p64, %p65
      %p67 = scmp.ne.s32.totalorder %s55, %s56
      %p68 = scmp.eq.s32.totalorder %s25, 1
      %p69 = por %p67, %p68
      %p71 = scmp.ne.s32.totalorder %s56, %s70
      %p72 = scmp.eq.s32.totalorder %s25, 0
      %p73 = por %p71, %p72
      %s75 = sadd.s32 %s74, 1
      %p78 = scmp.eq.s32.totalorder %s19, 1
      %p79 = scmp.ne.s32.totalorder %s74, %s76
      %p80 = scmp.eq.s32.totalorder %s19, 0
      %p81 = por %p79, %p80
      %p82 = scmp.ne.s32.totalorder %s74, %s76
      %p83 = scmp.eq.s32.totalorder %s24, 1
      %p84 = por %p82, %p83
      %p85 = scmp.ne.s32.totalorder %s76, %s77
      %p86 = scmp.eq.s32.totalorder %s24, 0
      %p87 = por %p85, %p86
      %p88 = scmp.ne.s32.totalorder %s76, %s77
      %p89 = scmp.eq.s32.totalorder %s25, 1
      %p90 = por %p88, %p89
      %p92 = scmp.ne.s32.totalorder %s77, %s91
      %p93 = scmp.eq.s32.totalorder %s25, 0
      %p94 = por %p92, %p93
      %s96 = sadd.s32 %s95, 1
      %p99 = scmp.eq.s32.totalorder %s19, 1
      %p100 = scmp.ne.s32.totalorder %s95, %s97
      %p101 = scmp.eq.s32.totalorder %s19, 0
      %p102 = por %p100, %p101
      %p103 = scmp.ne.s32.totalorder %s95, %s97
      %p104 = scmp.eq.s32.totalorder %s24, 1
      %p105 = por %p103, %p104
      %p106 = scmp.ne.s32.totalorder %s97, %s98
      %p107 = scmp.eq.s32.totalorder %s24, 0
      %p108 = por %p106, %p107
      %p109 = scmp.ne.s32.totalorder %s97, %s98
      %p110 = scmp.eq.s32.totalorder %s25, 1
      %p111 = por %p109, %p110
      %p113 = scmp.ne.s32.totalorder %s98, %s112
      %p114 = scmp.eq.s32.totalorder %s25, 0
      %p115 = por %p113, %p114
      %s117 = sadd.s32 %s116, 1
      %p120 = scmp.eq.s32.totalorder %s19, 1
      %p121 = scmp.ne.s32.totalorder %s116, %s118
      %p122 = scmp.eq.s32.totalorder %s19, 0
      %p123 = por %p121, %p122
      %p124 = scmp.ne.s32.totalorder %s116, %s118
      %p125 = scmp.eq.s32.totalorder %s24, 1
      %p126 = por %p124, %p125
      %p127 = scmp.ne.s32.totalorder %s118, %s119
      %p128 = scmp.eq.s32.totalorder %s24, 0
      %p129 = por %p127, %p128
      %p130 = scmp.ne.s32.totalorder %s118, %s119
      %p131 = scmp.eq.s32.totalorder %s25, 1
      %p132 = por %p130, %p131
      %p134 = scmp.ne.s32.totalorder %s119, %s133
      %p135 = scmp.eq.s32.totalorder %s25, 0
      %p136 = por %p134, %p135
      %s137 = ssub.s32 %s19, %s26
      %p138 = scmp.eq.s32.totalorder %s137, 0
      %s140 = sadd.s32 %s139, 1
      %s141 = scalar_select %p138, %s139, %s140
      %p144 = pneg %p138
      %p145 = scmp.eq.s32.totalorder %s19, 1
      %p146 = por %p144, %p145
      %p147 = scmp.ne.s32.totalorder %s139, %s142
      %p148 = scmp.eq.s32.totalorder %s19, 0
      %p149 = por %p147, %p148
      %p150 = scmp.ne.s32.totalorder %s139, %s142
      %p151 = scmp.eq.s32.totalorder %s24, 1
      %p152 = por %p150, %p151
      %p153 = scmp.ne.s32.totalorder %s142, %s143
      %p154 = scmp.eq.s32.totalorder %s24, 0
      %p155 = por %p153, %p154
      %p156 = scmp.ne.s32.totalorder %s142, %s143
      %p157 = scmp.eq.s32.totalorder %s25, 1
      %p158 = por %p156, %p157
      %p160 = scmp.ne.s32.totalorder %s143, %s159
      %p161 = scmp.eq.s32.totalorder %s25, 0
      %p162 = por %p160, %p161
      %p163 = scmp.le.s32.totalorder 1, %s19
      %p164 = scmp.lt.s32.totalorder %s19, 3
      %p165 = pnand %p163, %p164
      %p166 = pneg %p165
      // Predicated region
      $region9: #{net_forward.1} parent=5 // pred_check
        _
      $region10: #{net_forward.1} parent=5 // pred_check_branch
        %168 = sbr.rel (%p165) target = $region12
      $region11: #{net_forward.1} parent=5 // pred_region
        %s169 = ssub.s32 %s19, 1
        // Predicated region
        $region13: #{net_forward.1} parent=11 // pred_check
          %p170 = pneg %p66
        $region14: #{net_forward.1} parent=11 // pred_check_branch
          %172 = sbr.rel (%p170) target = $region16
        $region15: #{net_forward.1} parent=11 // pred_region
          %s174 = ssub.s32 2048, 2048
          %175 = vsyncadd [#allocation6], %s174
          %s176 = sshll.u32 [#allocation5], 4
          %s177 = int_to_ptr.vmem [resolvable:$true] %s176
          %182 = dma.hbm_to_vmem [thread:$0]  %s1, 2048, %s177, [#allocation6], 128, 128, 8
        $region16: #{net_forward.1} parent=11 // pred_fallthru
          _
        // Predicated region
        $region17: #{net_forward.1} parent=11 // pred_check
          %p183 = pneg %p87
        $region18: #{net_forward.1} parent=11 // pred_check_branch
          %185 = sbr.rel (%p183) target = $region20
        $region19: #{net_forward.1} parent=11 // pred_region
          %s187 = ssub.s32 16, 16
          %188 = vsyncadd [#allocation6], %s187
          %s190 = sshll.u32 [#allocation7], 4
          %s191 = int_to_ptr.vmem [resolvable:$true] %s190
          %193 = dma.hbm_to_vmem [thread:$0]  %s2, 16, %s191, [#allocation6]
        $region20: #{net_forward.1} parent=11 // pred_fallthru
          _
        // Predicated region
        $region21: #{net_forward.1} parent=11 // pred_check
          %p194 = pneg %p108
        $region22: #{net_forward.1} parent=11 // pred_check_branch
          %196 = sbr.rel (%p194) target = $region24
        $region23: #{net_forward.1} parent=11 // pred_region
          %s198 = ssub.s32 2048, 2048
          %199 = vsyncadd [#allocation9], %s198
          %s200 = sshll.u32 [#allocation8], 4
          %s201 = int_to_ptr.vmem [resolvable:$true] %s200
          %206 = dma.hbm_to_vmem [thread:$0]  %s3, 2048, %s201, [#allocation9], 128, 128, 8
        $region24: #{net_forward.1} parent=11 // pred_fallthru
          _
        // Predicated region
        $region25: #{net_forward.1} parent=11 // pred_check
          %p207 = pneg %p129
        $region26: #{net_forward.1} parent=11 // pred_check_branch
          %209 = sbr.rel (%p207) target = $region28
        $region27: #{net_forward.1} parent=11 // pred_region
          %s211 = ssub.s32 16, 16
          %212 = vsyncadd [#allocation9], %s211
          %s214 = sshll.u32 [#allocation10], 4
          %s215 = int_to_ptr.vmem [resolvable:$true] %s214
          %217 = dma.hbm_to_vmem [thread:$0]  %s4, 16, %s215, [#allocation9]
        $region28: #{net_forward.1} parent=11 // pred_fallthru
          _
      $region12: #{net_forward.1} parent=5 // pred_fallthru
        _
      %p218 = scmp.lt.s32.totalorder %s19, 2
      // Predicated region
      $region29: #{net_forward.1} parent=5 // pred_check
        %p219 = pneg %p218
      $region30: #{net_forward.1} parent=5 // pred_check_branch
        %221 = sbr.rel (%p219) target = $region32
      $region31: #{net_forward.1} parent=5 // pred_region
        // Predicated region
        $region33: #{net_forward.1} parent=31 // pred_check
          %p222 = pneg %p39
        $region34: #{net_forward.1} parent=31 // pred_check_branch
          %224 = sbr.rel (%p222) target = $region36
        $region35: #{net_forward.1} parent=31 // pred_region
          %s225 = sand.u32 %s29, 1
          %s226 = scalar_lea.sflag [#allocation3], %s225
          %s227 = sand.u32 %s29, 1
          %s228 = smul.addr %s227, 128
          %s229 = scalar_lea.vmem [#allocation2], %s228
          %s230 = smul.u32 16, %s19
          %s232 = ssub.s32 2048, 2048
          %233 = vsyncadd %s226, %s232
          %s234 = smul.addr %s230, 128
          %s235 = scalar_lea.hbm %s0, %s234
          %s236 = sshll.u32 %s229, 4
          %s237 = int_to_ptr.vmem [resolvable:$true] %s236
          %242 = dma.hbm_to_vmem [thread:$0]  %s235, 2048, %s237, %s226, 128, 128, 8
        $region36: #{net_forward.1} parent=31 // pred_fallthru
          _
      $region32: #{net_forward.1} parent=5 // pred_fallthru
        _
      %p243 = scmp.le.s32.totalorder 1, %s19
      %p244 = scmp.lt.s32.totalorder %s19, 3
      %p245 = pnand %p243, %p244
      %p246 = pneg %p245
      // Predicated region
      $region37: #{net_forward.1} parent=5 // pred_check
        _
      $region38: #{net_forward.1} parent=5 // pred_check_branch
        %248 = sbr.rel (%p245) target = $region40
      $region39: #{net_forward.1} parent=5 // pred_region
        %s249 = ssub.s32 %s19, 1
        %s250 = sand.u32 %s32, 1
        %s251 = scalar_lea.sflag [#allocation3], %s250
        %s252 = sand.u32 %s32, 1
        %s253 = smul.addr %s252, 128
        %s254 = scalar_lea.vmem [#allocation2], %s253
        // Predicated region
        $region41: #{net_forward.1} parent=39 // pred_check
          %p255 = pneg %p45
        $region42: #{net_forward.1} parent=39 // pred_check_branch
          %257 = sbr.rel (%p255) target = $region44
        $region43: #{net_forward.1} parent=39 // pred_region
          %258 = dma.done %s251, 2048
        $region44: #{net_forward.1} parent=39 // pred_fallthru
          _
        // Predicated region
        $region45: #{net_forward.1} parent=39 // pred_check
          %p259 = pneg %p66
        $region46: #{net_forward.1} parent=39 // pred_check_branch
          %261 = sbr.rel (%p259) target = $region48
        $region47: #{net_forward.1} parent=39 // pred_region
          %262 = dma.done [#allocation6], 2048
        $region48: #{net_forward.1} parent=39 // pred_fallthru
          _
        // Predicated region
        $region49: #{net_forward.1} parent=39 // pred_check
          %p263 = pneg %p87
        $region50: #{net_forward.1} parent=39 // pred_check_branch
          %265 = sbr.rel (%p263) target = $region52
        $region51: #{net_forward.1} parent=39 // pred_region
          %266 = dma.done [#allocation6], 16
        $region52: #{net_forward.1} parent=39 // pred_fallthru
          _
        // Predicated region
        $region53: #{net_forward.1} parent=39 // pred_check
          %p267 = pneg %p108
        $region54: #{net_forward.1} parent=39 // pred_check_branch
          %269 = sbr.rel (%p267) target = $region56
        $region55: #{net_forward.1} parent=39 // pred_region
          %270 = dma.done [#allocation9], 2048
        $region56: #{net_forward.1} parent=39 // pred_fallthru
          _
        // Predicated region
        $region57: #{net_forward.1} parent=39 // pred_check
          %p271 = pneg %p129
        $region58: #{net_forward.1} parent=39 // pred_check_branch
          %273 = sbr.rel (%p271) target = $region60
        $region59: #{net_forward.1} parent=39 // pred_region
          %274 = dma.done [#allocation9], 16
        $region60: #{net_forward.1} parent=39 // pred_fallthru
          _
        %s275 = sand.u32 %s32, 1
        %s276 = scalar_lea.sflag [#allocation3], %s275
        %s277 = sand.u32 %s32, 1
        %s278 = smul.addr %s277, 128
        %s279 = scalar_lea.vmem [#allocation2], %s278
        %p280 = pneg %p45
        %p281 = pneg %p42
        %p282 = pneg %p66
        %p283 = pneg %p63
        %p284 = pneg %p87
        %p285 = pneg %p84
        %p286 = pneg %p108
        %p287 = pneg %p105
        %p288 = pneg %p129
        %p289 = pneg %p126
        %p290 = pneg %p155
        %p291 = pneg %p152
        %s292 = sand.u32 %s142, 1
        %s293 = scalar_lea.sflag [#allocation4], %s292
        %s294 = sand.u32 %s142, 1
        %s295 = smul.addr %s294, 128
        %s296 = scalar_lea.vmem [#allocation11], %s295
        %s297 = smul.u32 16, %s24
        %s298 = smul.u32 16, %s24
        %v299 = vld [vmem:[%s254] sm:$0xff]
        %v300 = vld [vmem:[%s254 + $0x8] sm:$0xff]
        %v301 = vld [vmem:[%s254 + $0x10] sm:$0xff]
        %v302 = vld [vmem:[%s254 + $0x18] sm:$0xff]
        %v303 = vld [vmem:[%s254 + $0x20] sm:$0xff]
        %v304 = vld [vmem:[%s254 + $0x28] sm:$0xff]
        %v305 = vld [vmem:[%s254 + $0x30] sm:$0xff]
        %v306 = vld [vmem:[%s254 + $0x38] sm:$0xff]
        %v307 = vld [vmem:[%s254 + $0x40] sm:$0xff]
        %v308 = vld [vmem:[%s254 + $0x48] sm:$0xff]
        %v309 = vld [vmem:[%s254 + $0x50] sm:$0xff]
        %v310 = vld [vmem:[%s254 + $0x58] sm:$0xff]
        %v311 = vld [vmem:[%s254 + $0x60] sm:$0xff]
        %v312 = vld [vmem:[%s254 + $0x68] sm:$0xff]
        %v313 = vld [vmem:[%s254 + $0x70] sm:$0xff]
        %v314 = vld [vmem:[%s254 + $0x78] sm:$0xff]
        %v315 = vld [vmem:[#allocation5] sm:$0xff]
        %v316 = vld [vmem:[#allocation5 + $0x8] sm:$0xff]
        %v317 = vld [vmem:[#allocation5 + $0x10] sm:$0xff]
        %v318 = vld [vmem:[#allocation5 + $0x18] sm:$0xff]
        %v319 = vld [vmem:[#allocation5 + $0x20] sm:$0xff]
        %v320 = vld [vmem:[#allocation5 + $0x28] sm:$0xff]
        %v321 = vld [vmem:[#allocation5 + $0x30] sm:$0xff]
        %v322 = vld [vmem:[#allocation5 + $0x38] sm:$0xff]
        %v323 = vld [vmem:[#allocation5 + $0x40] sm:$0xff]
        %v324 = vld [vmem:[#allocation5 + $0x48] sm:$0xff]
        %v325 = vld [vmem:[#allocation5 + $0x50] sm:$0xff]
        %v326 = vld [vmem:[#allocation5 + $0x58] sm:$0xff]
        %v327 = vld [vmem:[#allocation5 + $0x60] sm:$0xff]
        %v328 = vld [vmem:[#allocation5 + $0x68] sm:$0xff]
        %v329 = vld [vmem:[#allocation5 + $0x70] sm:$0xff]
        %v330 = vld [vmem:[#allocation5 + $0x78] sm:$0xff]
        %v331 = vld [vmem:[#allocation7] sm:$0x1]
        %v333 = vlaneseq
        %v334 = vshrl.u32 %v333, 7
        %v335 = vsub.s32 0, %v334
        %v336 = vrot.slane %v331, %v335
        %338 = vmatprep.subr.mxu0 0.0
        %339 = vmatpush1.msra.mxu0 %v315
        %340 = vmatprep.subr.mxu0 0.0
        %341 = vmatpush1.msra.mxu0 %v316
        %342 = vmatprep.subr.mxu0 0.0
        %343 = vmatpush1.msra.mxu0 %v317
        %344 = vmatprep.subr.mxu0 0.0
        %345 = vmatpush1.msra.mxu0 %v318
        %346 = vmatprep.subr.mxu0 0.0
        %347 = vmatpush1.msra.mxu0 %v319
        %348 = vmatprep.subr.mxu0 0.0
        %349 = vmatpush1.msra.mxu0 %v320
        %350 = vmatprep.subr.mxu0 0.0
        %351 = vmatpush1.msra.mxu0 %v321
        %352 = vmatprep.subr.mxu0 0.0
        %353 = vmatpush1.msra.mxu0 %v322
        %354 = vmatprep.subr.mxu0 0.0
        %355 = vmatpush1.msra.mxu0 %v323
        %356 = vmatprep.subr.mxu0 0.0
        %357 = vmatpush1.msra.mxu0 %v324
        %358 = vmatprep.subr.mxu0 0.0
        %359 = vmatpush1.msra.mxu0 %v325
        %360 = vmatprep.subr.mxu0 0.0
        %361 = vmatpush1.msra.mxu0 %v326
        %362 = vmatprep.subr.mxu0 0.0
        %363 = vmatpush1.msra.mxu0 %v327
        %364 = vmatprep.subr.mxu0 0.0
        %365 = vmatpush1.msra.mxu0 %v328
        %366 = vmatprep.subr.mxu0 0.0
        %367 = vmatpush1.msra.mxu0 %v329
        %368 = vmatprep.subr.mxu0 0.0
        %369 = vmatpush1.msra.mxu0 %v330
        %370 = vmatprep.subr.mxu0 0.0
        %371 = vmatpush1.msra.mxu0 0.0
        %372 = vmatprep.subr.mxu0 0.0
        %373 = vmatpush1.msra.mxu0 0.0
        %374 = vmatprep.subr.mxu0 0.0
        %375 = vmatpush1.msra.mxu0 0.0
        %376 = vmatprep.subr.mxu0 0.0
        %377 = vmatpush1.msra.mxu0 0.0
        %378 = vmatprep.subr.mxu0 0.0
        %379 = vmatpush1.msra.mxu0 0.0
        %380 = vmatprep.subr.mxu0 0.0
        %381 = vmatpush1.msra.mxu0 0.0
        %382 = vmatprep.subr.mxu0 0.0
        %383 = vmatpush1.msra.mxu0 0.0
        %384 = vmatprep.subr.mxu0 0.0
        %385 = vmatpush1.msra.mxu0 0.0
        %386 = vmatprep.subr.mxu0 0.0
        %387 = vmatpush1.msra.mxu0 0.0
        %388 = vmatprep.subr.mxu0 0.0
        %389 = vmatpush1.msra.mxu0 0.0
        %390 = vmatprep.subr.mxu0 0.0
        %391 = vmatpush1.msra.mxu0 0.0
        %392 = vmatprep.subr.mxu0 0.0
        %393 = vmatpush1.msra.mxu0 0.0
        %394 = vmatprep.subr.mxu0 0.0
        %395 = vmatpush1.msra.mxu0 0.0
        %396 = vmatprep.subr.mxu0 0.0
        %397 = vmatpush1.msra.mxu0 0.0
        %398 = vmatprep.subr.mxu0 0.0
        %399 = vmatpush1.msra.mxu0 0.0
        %400 = vmatprep.subr.mxu0 0.0
        %401 = vmatpush1.msra.mxu0 0.0
        %402 = vmatprep.mubr.f32.mxu0 0.0
        %403 = vmatmul.mubr.f32.gmra.mrb[0].mxu0 %v299
        %v404 = vpop.f32.mrb[0].mxu0
        %v405 = vadd.f32 %v336, %v404
        %v406 = vpop.f32.mrb[0].mxu0
        %407 = vmatprep.mubr.f32.mxu0 0.0
        %408 = vmatmul.mubr.f32.gmra.mrb[0].mxu0 %v300
        %v409 = vpop.f32.mrb[0].mxu0
        %v410 = vadd.f32 %v336, %v409
        %v411 = vpop.f32.mrb[0].mxu0
        %412 = vmatprep.mubr.f32.mxu0 0.0
        %413 = vmatmul.mubr.f32.gmra.mrb[0].mxu0 %v301
        %v414 = vpop.f32.mrb[0].mxu0
        %v415 = vadd.f32 %v336, %v414
        %v416 = vpop.f32.mrb[0].mxu0
        %417 = vmatprep.mubr.f32.mxu0 0.0
        %418 = vmatmul.mubr.f32.gmra.mrb[0].mxu0 %v302
        %v419 = vpop.f32.mrb[0].mxu0
        %v420 = vadd.f32 %v336, %v419
        %v421 = vpop.f32.mrb[0].mxu0
        %422 = vmatprep.mubr.f32.mxu0 0.0
        %423 = vmatmul.mubr.f32.gmra.mrb[0].mxu0 %v303
        %v424 = vpop.f32.mrb[0].mxu0
        %v425 = vadd.f32 %v336, %v424
        %v426 = vpop.f32.mrb[0].mxu0
        %427 = vmatprep.mubr.f32.mxu0 0.0
        %428 = vmatmul.mubr.f32.gmra.mrb[0].mxu0 %v304
        %v429 = vpop.f32.mrb[0].mxu0
        %v430 = vadd.f32 %v336, %v429
        %v431 = vpop.f32.mrb[0].mxu0
        %432 = vmatprep.mubr.f32.mxu0 0.0
        %433 = vmatmul.mubr.f32.gmra.mrb[0].mxu0 %v305
        %v434 = vpop.f32.mrb[0].mxu0
        %v435 = vadd.f32 %v336, %v434
        %v436 = vpop.f32.mrb[0].mxu0
        %437 = vmatprep.mubr.f32.mxu0 0.0
        %438 = vmatmul.mubr.f32.gmra.mrb[0].mxu0 %v306
        %v439 = vpop.f32.mrb[0].mxu0
        %v440 = vadd.f32 %v336, %v439
        %v441 = vpop.f32.mrb[0].mxu0
        %442 = vmatprep.mubr.f32.mxu0 0.0
        %443 = vmatmul.mubr.f32.gmra.mrb[0].mxu0 %v307
        %v444 = vpop.f32.mrb[0].mxu0
        %v445 = vadd.f32 %v336, %v444
        %v446 = vpop.f32.mrb[0].mxu0
        %447 = vmatprep.mubr.f32.mxu0 0.0
        %448 = vmatmul.mubr.f32.gmra.mrb[0].mxu0 %v308
        %v449 = vpop.f32.mrb[0].mxu0
        %v450 = vadd.f32 %v336, %v449
        %v451 = vpop.f32.mrb[0].mxu0
        %452 = vmatprep.mubr.f32.mxu0 0.0
        %453 = vmatmul.mubr.f32.gmra.mrb[0].mxu0 %v309
        %v454 = vpop.f32.mrb[0].mxu0
        %v455 = vadd.f32 %v336, %v454
        %v456 = vpop.f32.mrb[0].mxu0
        %457 = vmatprep.mubr.f32.mxu0 0.0
        %458 = vmatmul.mubr.f32.gmra.mrb[0].mxu0 %v310
        %v459 = vpop.f32.mrb[0].mxu0
        %v460 = vadd.f32 %v336, %v459
        %v461 = vpop.f32.mrb[0].mxu0
        %462 = vmatprep.mubr.f32.mxu0 0.0
        %463 = vmatmul.mubr.f32.gmra.mrb[0].mxu0 %v311
        %v464 = vpop.f32.mrb[0].mxu0
        %v465 = vadd.f32 %v336, %v464
        %v466 = vpop.f32.mrb[0].mxu0
        %467 = vmatprep.mubr.f32.mxu0 0.0
        %468 = vmatmul.mubr.f32.gmra.mrb[0].mxu0 %v312
        %v469 = vpop.f32.mrb[0].mxu0
        %v470 = vadd.f32 %v336, %v469
        %v471 = vpop.f32.mrb[0].mxu0
        %472 = vmatprep.mubr.f32.mxu0 0.0
        %473 = vmatmul.mubr.f32.gmra.mrb[0].mxu0 %v313
        %v474 = vpop.f32.mrb[0].mxu0
        %v475 = vadd.f32 %v336, %v474
        %v476 = vpop.f32.mrb[0].mxu0
        %477 = vmatprep.mubr.f32.mxu0 0.0
        %478 = vmatmul.mubr.f32.gmra.mrb[0].mxu0 %v314
        %v479 = vpop.f32.mrb[0].mxu0
        %v480 = vadd.f32 %v336, %v479
        %v481 = vpop.f32.mrb[0].mxu0
        %482 = vdwg.mxu0
        %v483 = vmax.f32 %v405, 0.0
        %v484 = vmax.f32 %v410, 0.0
        %v485 = vmax.f32 %v415, 0.0
        %v486 = vmax.f32 %v420, 0.0
        %v487 = vmax.f32 %v425, 0.0
        %v488 = vmax.f32 %v430, 0.0
        %v489 = vmax.f32 %v435, 0.0
        %v490 = vmax.f32 %v440, 0.0
        %v491 = vmax.f32 %v445, 0.0
        %v492 = vmax.f32 %v450, 0.0
        %v493 = vmax.f32 %v455, 0.0
        %v494 = vmax.f32 %v460, 0.0
        %v495 = vmax.f32 %v465, 0.0
        %v496 = vmax.f32 %v470, 0.0
        %v497 = vmax.f32 %v475, 0.0
        %v498 = vmax.f32 %v480, 0.0
        %v499 = vld [vmem:[#allocation8] sm:$0xff]
        %v500 = vld [vmem:[#allocation8 + $0x8] sm:$0xff]
        %v501 = vld [vmem:[#allocation8 + $0x10] sm:$0xff]
        %v502 = vld [vmem:[#allocation8 + $0x18] sm:$0xff]
        %v503 = vld [vmem:[#allocation8 + $0x20] sm:$0xff]
        %v504 = vld [vmem:[#allocation8 + $0x28] sm:$0xff]
        %v505 = vld [vmem:[#allocation8 + $0x30] sm:$0xff]
        %v506 = vld [vmem:[#allocation8 + $0x38] sm:$0xff]
        %v507 = vld [vmem:[#allocation8 + $0x40] sm:$0xff]
        %v508 = vld [vmem:[#allocation8 + $0x48] sm:$0xff]
        %v509 = vld [vmem:[#allocation8 + $0x50] sm:$0xff]
        %v510 = vld [vmem:[#allocation8 + $0x58] sm:$0xff]
        %v511 = vld [vmem:[#allocation8 + $0x60] sm:$0xff]
        %v512 = vld [vmem:[#allocation8 + $0x68] sm:$0xff]
        %v513 = vld [vmem:[#allocation8 + $0x70] sm:$0xff]
        %v514 = vld [vmem:[#allocation8 + $0x78] sm:$0xff]
        %v515 = vld [vmem:[#allocation10] sm:$0x1]
        %v517 = vlaneseq
        %v518 = vshrl.u32 %v517, 7
        %v519 = vsub.s32 0, %v518
        %v520 = vrot.slane %v515, %v519
        %522 = vmatprep.subr.mxu0 0.0
        %523 = vmatpush1.msra.mxu0 %v499
        %524 = vmatprep.subr.mxu0 0.0
        %525 = vmatpush1.msra.mxu0 %v500
        %526 = vmatprep.subr.mxu0 0.0
        %527 = vmatpush1.msra.mxu0 %v501
        %528 = vmatprep.subr.mxu0 0.0
        %529 = vmatpush1.msra.mxu0 %v502
        %530 = vmatprep.subr.mxu0 0.0
        %531 = vmatpush1.msra.mxu0 %v503
        %532 = vmatprep.subr.mxu0 0.0
        %533 = vmatpush1.msra.mxu0 %v504
        %534 = vmatprep.subr.mxu0 0.0
        %535 = vmatpush1.msra.mxu0 %v505
        %536 = vmatprep.subr.mxu0 0.0
        %537 = vmatpush1.msra.mxu0 %v506
        %538 = vmatprep.subr.mxu0 0.0
        %539 = vmatpush1.msra.mxu0 %v507
        %540 = vmatprep.subr.mxu0 0.0
        %541 = vmatpush1.msra.mxu0 %v508
        %542 = vmatprep.subr.mxu0 0.0
        %543 = vmatpush1.msra.mxu0 %v509
        %544 = vmatprep.subr.mxu0 0.0
        %545 = vmatpush1.msra.mxu0 %v510
        %546 = vmatprep.subr.mxu0 0.0
        %547 = vmatpush1.msra.mxu0 %v511
        %548 = vmatprep.subr.mxu0 0.0
        %549 = vmatpush1.msra.mxu0 %v512
        %550 = vmatprep.subr.mxu0 0.0
        %551 = vmatpush1.msra.mxu0 %v513
        %552 = vmatprep.subr.mxu0 0.0
        %553 = vmatpush1.msra.mxu0 %v514
        %554 = vmatprep.subr.mxu0 0.0
        %555 = vmatpush1.msra.mxu0 0.0
        %556 = vmatprep.subr.mxu0 0.0
        %557 = vmatpush1.msra.mxu0 0.0
        %558 = vmatprep.subr.mxu0 0.0
        %559 = vmatpush1.msra.mxu0 0.0
        %560 = vmatprep.subr.mxu0 0.0
        %561 = vmatpush1.msra.mxu0 0.0
        %562 = vmatprep.subr.mxu0 0.0
        %563 = vmatpush1.msra.mxu0 0.0
        %564 = vmatprep.subr.mxu0 0.0
        %565 = vmatpush1.msra.mxu0 0.0
        %566 = vmatprep.subr.mxu0 0.0
        %567 = vmatpush1.msra.mxu0 0.0
        %568 = vmatprep.subr.mxu0 0.0
        %569 = vmatpush1.msra.mxu0 0.0
        %570 = vmatprep.subr.mxu0 0.0
        %571 = vmatpush1.msra.mxu0 0.0
        %572 = vmatprep.subr.mxu0 0.0
        %573 = vmatpush1.msra.mxu0 0.0
        %574 = vmatprep.subr.mxu0 0.0
        %575 = vmatpush1.msra.mxu0 0.0
        %576 = vmatprep.subr.mxu0 0.0
        %577 = vmatpush1.msra.mxu0 0.0
        %578 = vmatprep.subr.mxu0 0.0
        %579 = vmatpush1.msra.mxu0 0.0
        %580 = vmatprep.subr.mxu0 0.0
        %581 = vmatpush1.msra.mxu0 0.0
        %582 = vmatprep.subr.mxu0 0.0
        %583 = vmatpush1.msra.mxu0 0.0
        %584 = vmatprep.subr.mxu0 0.0
        %585 = vmatpush1.msra.mxu0 0.0
        %586 = vmatprep.mubr.f32.mxu0 0.0
        %587 = vmatmul.mubr.f32.gmra.mrb[0].mxu0 %v483
        %v588 = vpop.f32.mrb[0].mxu0
        %v589 = vadd.f32 %v520, %v588
        %v590 = vpop.f32.mrb[0].mxu0
        %591 = vmatprep.mubr.f32.mxu0 0.0
        %592 = vmatmul.mubr.f32.gmra.mrb[0].mxu0 %v484
        %v593 = vpop.f32.mrb[0].mxu0
        %v594 = vadd.f32 %v520, %v593
        %v595 = vpop.f32.mrb[0].mxu0
        %596 = vmatprep.mubr.f32.mxu0 0.0
        %597 = vmatmul.mubr.f32.gmra.mrb[0].mxu0 %v485
        %v598 = vpop.f32.mrb[0].mxu0
        %v599 = vadd.f32 %v520, %v598
        %v600 = vpop.f32.mrb[0].mxu0
        %601 = vmatprep.mubr.f32.mxu0 0.0
        %602 = vmatmul.mubr.f32.gmra.mrb[0].mxu0 %v486
        %v603 = vpop.f32.mrb[0].mxu0
        %v604 = vadd.f32 %v520, %v603
        %v605 = vpop.f32.mrb[0].mxu0
        %606 = vmatprep.mubr.f32.mxu0 0.0
        %607 = vmatmul.mubr.f32.gmra.mrb[0].mxu0 %v487
        %v608 = vpop.f32.mrb[0].mxu0
        %v609 = vadd.f32 %v520, %v608
        %v610 = vpop.f32.mrb[0].mxu0
        %611 = vmatprep.mubr.f32.mxu0 0.0
        %612 = vmatmul.mubr.f32.gmra.mrb[0].mxu0 %v488
        %v613 = vpop.f32.mrb[0].mxu0
        %v614 = vadd.f32 %v520, %v613
        %v615 = vpop.f32.mrb[0].mxu0
        %616 = vmatprep.mubr.f32.mxu0 0.0
        %617 = vmatmul.mubr.f32.gmra.mrb[0].mxu0 %v489
        %v618 = vpop.f32.mrb[0].mxu0
        %v619 = vadd.f32 %v520, %v618
        %v620 = vpop.f32.mrb[0].mxu0
        %621 = vmatprep.mubr.f32.mxu0 0.0
        %622 = vmatmul.mubr.f32.gmra.mrb[0].mxu0 %v490
        %v623 = vpop.f32.mrb[0].mxu0
        %v624 = vadd.f32 %v520, %v623
        %v625 = vpop.f32.mrb[0].mxu0
        %626 = vmatprep.mubr.f32.mxu0 0.0
        %627 = vmatmul.mubr.f32.gmra.mrb[0].mxu0 %v491
        %v628 = vpop.f32.mrb[0].mxu0
        %v629 = vadd.f32 %v520, %v628
        %v630 = vpop.f32.mrb[0].mxu0
        %631 = vmatprep.mubr.f32.mxu0 0.0
        %632 = vmatmul.mubr.f32.gmra.mrb[0].mxu0 %v492
        %v633 = vpop.f32.mrb[0].mxu0
        %v634 = vadd.f32 %v520, %v633
        %v635 = vpop.f32.mrb[0].mxu0
        %636 = vmatprep.mubr.f32.mxu0 0.0
        %637 = vmatmul.mubr.f32.gmra.mrb[0].mxu0 %v493
        %v638 = vpop.f32.mrb[0].mxu0
        %v639 = vadd.f32 %v520, %v638
        %v640 = vpop.f32.mrb[0].mxu0
        %641 = vmatprep.mubr.f32.mxu0 0.0
        %642 = vmatmul.mubr.f32.gmra.mrb[0].mxu0 %v494
        %v643 = vpop.f32.mrb[0].mxu0
        %v644 = vadd.f32 %v520, %v643
        %v645 = vpop.f32.mrb[0].mxu0
        %646 = vmatprep.mubr.f32.mxu0 0.0
        %647 = vmatmul.mubr.f32.gmra.mrb[0].mxu0 %v495
        %v648 = vpop.f32.mrb[0].mxu0
        %v649 = vadd.f32 %v520, %v648
        %v650 = vpop.f32.mrb[0].mxu0
        %651 = vmatprep.mubr.f32.mxu0 0.0
        %652 = vmatmul.mubr.f32.gmra.mrb[0].mxu0 %v496
        %v653 = vpop.f32.mrb[0].mxu0
        %v654 = vadd.f32 %v520, %v653
        %v655 = vpop.f32.mrb[0].mxu0
        %656 = vmatprep.mubr.f32.mxu0 0.0
        %657 = vmatmul.mubr.f32.gmra.mrb[0].mxu0 %v497
        %v658 = vpop.f32.mrb[0].mxu0
        %v659 = vadd.f32 %v520, %v658
        %v660 = vpop.f32.mrb[0].mxu0
        %661 = vmatprep.mubr.f32.mxu0 0.0
        %662 = vmatmul.mubr.f32.gmra.mrb[0].mxu0 %v498
        %v663 = vpop.f32.mrb[0].mxu0
        %v664 = vadd.f32 %v520, %v663
        %v665 = vpop.f32.mrb[0].mxu0
        %666 = vdwg.mxu0
        %667 = vst [vmem:[%s296] sm:$0xff] %v589
        %668 = vst [vmem:[%s296 + $0x8] sm:$0xff] %v594
        %669 = vst [vmem:[%s296 + $0x10] sm:$0xff] %v599
        %670 = vst [vmem:[%s296 + $0x18] sm:$0xff] %v604
        %671 = vst [vmem:[%s296 + $0x20] sm:$0xff] %v609
        %672 = vst [vmem:[%s296 + $0x28] sm:$0xff] %v614
        %673 = vst [vmem:[%s296 + $0x30] sm:$0xff] %v619
        %674 = vst [vmem:[%s296 + $0x38] sm:$0xff] %v624
        %675 = vst [vmem:[%s296 + $0x40] sm:$0xff] %v629
        %676 = vst [vmem:[%s296 + $0x48] sm:$0xff] %v634
        %677 = vst [vmem:[%s296 + $0x50] sm:$0xff] %v639
        %678 = vst [vmem:[%s296 + $0x58] sm:$0xff] %v644
        %679 = vst [vmem:[%s296 + $0x60] sm:$0xff] %v649
        %680 = vst [vmem:[%s296 + $0x68] sm:$0xff] %v654
        %681 = vst [vmem:[%s296 + $0x70] sm:$0xff] %v659
        %682 = vst [vmem:[%s296 + $0x78] sm:$0xff] %v664
        %s683 = sand.u32 %s142, 1
        %s684 = scalar_lea.sflag [#allocation4], %s683
        %s685 = sand.u32 %s142, 1
        %s686 = smul.addr %s685, 128
        %s687 = scalar_lea.vmem [#allocation11], %s686
        // Predicated region
        $region61: #{net_forward.1} parent=39 // pred_check
          %p688 = pneg %p152
        $region62: #{net_forward.1} parent=39 // pred_check_branch
          %690 = sbr.rel (%p688) target = $region64
        $region63: #{net_forward.1} parent=39 // pred_region
          %s691 = smul.u32 16, %s24
          %s693 = ssub.s32 2048, 2048
          %694 = vsyncadd %s684, %s693
          %s695 = smul.addr %s691, 128
          %s696 = scalar_lea.hbm %s5, %s695
          %s697 = sshll.u32 %s687, 4
          %s698 = int_to_ptr.vmem [resolvable:$true] %s697
          %703 = dma.vmem_to_hbm [thread:$0]  %s698, 2048, %s696, %s684, 128, 128, 8
        $region64: #{net_forward.1} parent=39 // pred_fallthru
          _
      $region40: #{net_forward.1} parent=5 // pred_fallthru
        _
      %p704 = scmp.le.s32.totalorder 2, %s19
      // Predicated region
      $region65: #{net_forward.1} parent=5 // pred_check
        %p705 = pneg %p704
      $region66: #{net_forward.1} parent=5 // pred_check_branch
        %707 = sbr.rel (%p705) target = $region68
      $region67: #{net_forward.1} parent=5 // pred_region
        %s708 = ssub.s32 %s19, 2
        // Predicated region
        $region69: #{net_forward.1} parent=67 // pred_check
          %p709 = pneg %p158
        $region70: #{net_forward.1} parent=67 // pred_check_branch
          %711 = sbr.rel (%p709) target = $region72
        $region71: #{net_forward.1} parent=67 // pred_region
          %s712 = sand.u32 %s143, 1
          %s713 = scalar_lea.sflag [#allocation4], %s712
          %s714 = sand.u32 %s143, 1
          %s715 = smul.addr %s714, 128
          %s716 = scalar_lea.vmem [#allocation11], %s715
          %717 = dma.done %s713, 2048
        $region72: #{net_forward.1} parent=67 // pred_fallthru
          _
      $region68: #{net_forward.1} parent=5 // pred_fallthru
        _
    $region6: #{net_forward.1} parent=1 // loop_footer
      %s23 = sadd.s32 1, %s19
    $region7: #{net_forward.1} parent=1 // loop_footer_branch
      %18 = sbr.rel target = $region3
    $region8: #{net_forward.1} parent=1 // loop_exit
      _
    %718 = vsyncpa [#allocation3], 1
    %s719 = scalar_lea.sflag [#allocation3], 1
    %720 = vsyncpa %s719, 1
    %721 = vsyncpa [#allocation6], 1
    %722 = vsyncpa [#allocation9], 1
    %723 = vsyncpa [#allocation4], 1
    %s724 = scalar_lea.sflag [#allocation4], 1
    %725 = vsyncpa %s724, 1

</llo_original>
